<compile_context>
chip_gen: v6e
topology: v6e:2x2x1
jax: 0.10.0
libtpu: 0.0.40
codegen_flags: <defaults>
</compile_context>

<pallas_src>
import math

import jax
import jax.numpy as jnp
from jax.experimental import pallas as pl
from jax.experimental.pallas import tpu as pltpu


def _add_pe_kernel(x_ref, proj_ref, o_ref):
    # x_ref:    (1, C, TP)  this batch / pixel-tile slab
    # proj_ref: (C, TP)     precomputed projection of the positional grid (f32)
    # o_ref:    (1, C, TP)
    x = x_ref[...].astype(jnp.float32)
    o_ref[...] = (x + proj_ref[...][None, :, :]).astype(o_ref.dtype)


def _pick_pixel_tile(P, C, itemsize, target_bytes=4 << 20):
    """Largest multiple-of-128 divisor of P with block bytes <= target (or full P)."""
    if P % 128 != 0:
        return P  # full-extent last dim is always a legal block shape
    max_tp = max(128, (target_bytes // max(1, C * itemsize)) // 128 * 128)
    tp = min(P, max_tp)
    while P % tp != 0:
        tp -= 128
    return tp


def cartesian_positional_embedding(x_nchw, weight, bias, pe):
    """x_nchw: (B, C, S, S); weight: (C, 4, 1, 1); bias: (C,); pe: (1, 4, S, S)."""
    B, C, S, _ = x_nchw.shape
    P = S * S

    # Native layout, no transposes: just flatten spatial dims (free reshape).
    x = x_nchw.reshape(B, C, P)                                   # (B, C, P)

    # Precompute the (tiny) 1x1-conv projection of the fixed grid once.
    w = weight.reshape(C, 4).astype(jnp.float32)                  # (C, 4)
    pe_flat = pe.reshape(4, P).astype(jnp.float32)                # (4, P)
    proj = jnp.dot(w, pe_flat) + bias.astype(jnp.float32)[:, None]  # (C, P) f32

    TP = _pick_pixel_tile(P, C, x.dtype.itemsize)
    grid = (B, P // TP)

    out = pl.pallas_call(
        _add_pe_kernel,
        out_shape=jax.ShapeDtypeStruct((B, C, P), x.dtype),
        grid_spec=pltpu.PrefetchScalarGridSpec(
            num_scalar_prefetch=0,
            grid=grid,
            in_specs=[
                pl.BlockSpec((1, C, TP), lambda b, j: (b, 0, j)),  # x slab
                pl.BlockSpec((C, TP), lambda b, j: (0, j)),        # proj tile
            ],
            out_specs=pl.BlockSpec((1, C, TP), lambda b, j: (b, 0, j)),
        ),
        compiler_params=pltpu.CompilerParams(
            dimension_semantics=("parallel", "parallel")),
    )(x, proj)

    return out.reshape(B, C, S, S)


def build_grid(side_length):
    """Matches CartesianPositionalEmbedding.build_grid -> (4, S, S)."""
    coords = jnp.linspace(0.0, 1.0, side_length + 1)
    coords = 0.5 * (coords[:-1] + coords[1:])
    # torch.meshgrid default is 'ij': grid_y[i,j]=coords[i], grid_x[i,j]=coords[j]
    grid_y, grid_x = jnp.meshgrid(coords, coords, indexing="ij")
    return jnp.stack((grid_x, grid_y, 1.0 - grid_x, 1.0 - grid_y), axis=0)


def init_params(key, channels):
    """Xavier-uniform conv weight (C,4,1,1), zero bias — deterministic."""
    fan_in, fan_out = 4, channels
    bound = math.sqrt(6.0 / (fan_in + fan_out))
    weight = jax.random.uniform(
        key, (channels, 4, 1, 1), dtype=jnp.float32, minval=-bound, maxval=bound)
    bias = jnp.zeros((channels,), dtype=jnp.float32)
    return weight, bias


if __name__ == "__main__":
    B, C, S = 2, 32, 16  # small shapes consistent with the module

    key = jax.random.PRNGKey(0)
    k_w, k_x = jax.random.split(key)

    weight, bias = init_params(k_w, C)
    pe = build_grid(S)[None]                                   # (1, 4, S, S)
    x = jax.random.normal(k_x, (B, C, S, S), dtype=jnp.float32)

    out = cartesian_positional_embedding(x, weight, bias, pe)
    out = jax.block_until_ready(out)

    # pure-JAX reference of the forward pass (1x1 conv == einsum over channels)
    proj_ref = jnp.einsum("ok,khw->ohw", weight.reshape(C, 4), pe[0]) + bias[:, None, None]
    ref = x + proj_ref[None]

    assert out.shape == (B, C, S, S)
    assert jnp.allclose(out, ref, atol=1e-5, rtol=1e-5)
    print("KERNEL_OK")
</pallas_src>

<mosaic_0001>
module attributes {stable_mosaic.version = 11 : i64} {
  func.func @_add_pe_kernel(%arg0: i32, %arg1: i32, %arg2: memref<1x32x256xf32, #tpu.memory_space<vmem>>, %arg3: memref<32x256xf32, #tpu.memory_space<vmem>>, %arg4: memref<1x32x256xf32, #tpu.memory_space<vmem>>) attributes {dimension_semantics = [#tpu.dimension_semantics<parallel>, #tpu.dimension_semantics<parallel>], iteration_bounds = array<i64: 2, 1>, scalar_prefetch = 0 : i64, scratch_operands = 0 : i64, tpu.core_type = #tpu.core_type<tc>, window_params = [{transform_indices = @transform_0, window_bounds = array<i64: 1, 32, 256>}, {transform_indices = @transform_1, window_bounds = array<i64: 32, 256>}, {transform_indices = @transform_2, window_bounds = array<i64: 1, 32, 256>}]} {
    %c0 = arith.constant 0 : index
    %c0_0 = arith.constant 0 : index
    %c0_1 = arith.constant 0 : index
    %0 = vector.load %arg2[%c0, %c0_0, %c0_1] : memref<1x32x256xf32, #tpu.memory_space<vmem>>, vector<1x32x256xf32>
    %c0_2 = arith.constant 0 : index
    %c0_3 = arith.constant 0 : index
    %1 = vector.load %arg3[%c0_2, %c0_3] : memref<32x256xf32, #tpu.memory_space<vmem>>, vector<32x256xf32>
    %2 = vector.shape_cast %1 : vector<32x256xf32> to vector<1x32x256xf32>
    %3 = arith.addf %0, %2 : vector<1x32x256xf32>
    %c0_4 = arith.constant 0 : index
    %c0_5 = arith.constant 0 : index
    %c0_6 = arith.constant 0 : index
    %4 = vector.load %arg4[%c0_4, %c0_5, %c0_6] : memref<1x32x256xf32, #tpu.memory_space<vmem>>, vector<1x32x256xf32>
    tpu.vector_store %arg4[%c0_4, %c0_5, %c0_6], %3 {strides = array<i32>} : memref<1x32x256xf32, #tpu.memory_space<vmem>>, vector<1x32x256xf32>,
    return
  }
  func.func @transform_0(%arg0: i32, %arg1: i32) -> (i32, i32, i32) {
    %c0_i32 = arith.constant 0 : i32
    %c0_i32_0 = arith.constant 0 : i32
    return %arg0, %c0_i32, %arg1 : i32, i32, i32
  }
  func.func @transform_1(%arg0: i32, %arg1: i32) -> (i32, i32) {
    %c0_i32 = arith.constant 0 : i32
    %c0_i32_0 = arith.constant 0 : i32
    return %c0_i32, %arg1 : i32, i32
  }
  func.func @transform_2(%arg0: i32, %arg1: i32) -> (i32, i32, i32) {
    %c0_i32 = arith.constant 0 : i32
    %c0_i32_0 = arith.constant 0 : i32
    return %arg0, %c0_i32, %arg1 : i32, i32, i32
  }
}

</mosaic_0001>

<llo_original>
// kernel: tpu_custom_call.1
$region0: #{tpu_custom_call.1}
  #allocation0 [shape = 'u32[]', space=smem, size = 0x4, offset = 0x4, fixed_abs, tag = 'smem constant byte address 0x4 - core index']
  #allocation1 [shape = 'u32[144,128]{1,0:T(1,128)}', space=vmem, size = 0x12000, scoped, tag = 'internal scratch']
  %s0 = inlined_call_operand.hbm [shape: f32[2,32,256], index: 0, kind: input, shape index: {}]
  %s1 = inlined_call_operand.hbm [shape: f32[32,256], index: 1, kind: input, shape index: {}]
  %s2 = inlined_call_operand.hbm [shape: f32[2,32,256], index: 2, kind: output, shape index: {}]
  %s3 = sld [smem:[#allocation0]]
  $region49: #{tpu_custom_call.1} parent=0
    _
  %s5 = ssub.s32 1, %s3
  %s6 = scalar_select 0, %s5, %s3
  $region1: #{tpu_custom_call.1} parent=0
    #allocation2 [shape = 'u8[65536]{0}', space=vmem, size = 0x10000, scoped, tag = 'input window, operand 0']
    #allocation3 [shape = 's32[2]{0}', space=sflag, size = 0x8, scoped, tag = 'scoped memory for tpu_custom_call.1']
    #allocation4 [shape = 's32[2]{0}', space=sflag, size = 0x8, scoped, tag = 'scoped memory for tpu_custom_call.1']
    #allocation5 [shape = 'u8[32768]{0}', space=vmem, size = 0x8000, scoped, tag = 'input window, operand 1, single buffered']
    #allocation6 [shape = 's32[1]{0}', space=sflag, size = 0x4, scoped, tag = 'scoped memory for tpu_custom_call.1']
    #allocation7 [shape = 'u8[65536]{0}', space=vmem, size = 0x10000, scoped, tag = 'output window, operand 0']
    %7 = vsyncpa [#allocation3], 0
    %s8 = scalar_lea.sflag [#allocation3], 1
    %9 = vsyncpa %s8, 0
    %10 = vsyncpa [#allocation6], 0
    %11 = vsyncpa [#allocation4], 0
    %s12 = scalar_lea.sflag [#allocation4], 1
    %13 = vsyncpa %s12, 0
    loop: start=0, step=1, limit=4
    $region2: #{tpu_custom_call.1} parent=1 // loop_pre_header
      _
    $region3: #{tpu_custom_call.1} parent=1 // loop_header
      %s15 = sphi 0, %s19
      %p16 = scmp.ge.s32.totalorder %s15, 4
      %s22 = sphi 0, %s34
      %s23 = sphi 0, %s30
      %s24 = sphi 0, %s22
      %s25 = sphi 0, %s23
      %s26 = sphi 0, %s24
      %s27 = sphi 0, %s25
      %s39 = sphi 0, %s41
      %s42 = sphi 0, %s39
      %s43 = sphi 0, %s42
      %s59 = sphi 0, %s43
      %s65 = sphi 0, %s67
      %s68 = sphi 0, %s65
      %s69 = sphi 0, %s68
      %s85 = sphi 0, %s69
      %s93 = sphi 0, %s95
      %s96 = sphi 0, %s93
      %s97 = sphi 0, %s96
      %s113 = sphi 0, %s97
    $region4: #{tpu_custom_call.1} parent=1 // loop_header_branch
      %18 = sbr.rel (%p16) target = $region8
    $region5: #{tpu_custom_call.1} parent=1 // loop_body
      %s20 = ssub.s32 %s15, 1
      %s21 = ssub.s32 %s15, 2
      %s28 = sadd.s32 1, %s23
      %p29 = scmp.ge.s32.totalorder %s28, 1
      %s30 = scalar_select %p29, 0, %s28
      %s31 = sadd.s32 1, %s22
      %s32 = scalar_select %p29, %s31, %s22
      %p33 = scmp.ge.s32.totalorder %s32, 2
      %s34 = scalar_select %p33, 0, %s32
      %s35 = ssub.s32 %s22, %s34
      %s36 = ssub.s32 %s23, %s30
      %s37 = sor.u32 %s35, %s36
      %p38 = scmp.eq.s32.totalorder %s37, 0
      %s40 = sadd.s32 %s39, 1
      %s41 = scalar_select %p38, %s39, %s40
      %p44 = pneg %p38
      %p45 = scmp.eq.s32.totalorder %s15, 1
      %p46 = por %p44, %p45
      %p47 = scmp.ne.s32.totalorder %s39, %s42
      %p48 = scmp.eq.s32.totalorder %s15, 0
      %p49 = por %p47, %p48
      %p50 = scmp.ne.s32.totalorder %s39, %s42
      %p51 = scmp.eq.s32.totalorder %s20, 1
      %p52 = por %p50, %p51
      %p53 = scmp.ne.s32.totalorder %s42, %s43
      %p54 = scmp.eq.s32.totalorder %s20, 0
      %p55 = por %p53, %p54
      %p56 = scmp.ne.s32.totalorder %s42, %s43
      %p57 = scmp.eq.s32.totalorder %s21, 1
      %p58 = por %p56, %p57
      %p60 = scmp.ne.s32.totalorder %s43, %s59
      %p61 = scmp.eq.s32.totalorder %s21, 0
      %p62 = por %p60, %p61
      %s63 = ssub.s32 %s23, %s30
      %p64 = scmp.eq.s32.totalorder %s63, 0
      %s66 = sadd.s32 %s65, 1
      %s67 = scalar_select %p64, %s65, %s66
      %p70 = pneg %p64
      %p71 = scmp.eq.s32.totalorder %s15, 1
      %p72 = por %p70, %p71
      %p73 = scmp.ne.s32.totalorder %s65, %s68
      %p74 = scmp.eq.s32.totalorder %s15, 0
      %p75 = por %p73, %p74
      %p76 = scmp.ne.s32.totalorder %s65, %s68
      %p77 = scmp.eq.s32.totalorder %s20, 1
      %p78 = por %p76, %p77
      %p79 = scmp.ne.s32.totalorder %s68, %s69
      %p80 = scmp.eq.s32.totalorder %s20, 0
      %p81 = por %p79, %p80
      %p82 = scmp.ne.s32.totalorder %s68, %s69
      %p83 = scmp.eq.s32.totalorder %s21, 1
      %p84 = por %p82, %p83
      %p86 = scmp.ne.s32.totalorder %s69, %s85
      %p87 = scmp.eq.s32.totalorder %s21, 0
      %p88 = por %p86, %p87
      %s89 = ssub.s32 %s22, %s34
      %s90 = ssub.s32 %s23, %s30
      %s91 = sor.u32 %s89, %s90
      %p92 = scmp.eq.s32.totalorder %s91, 0
      %s94 = sadd.s32 %s93, 1
      %s95 = scalar_select %p92, %s93, %s94
      %p98 = pneg %p92
      %p99 = scmp.eq.s32.totalorder %s15, 1
      %p100 = por %p98, %p99
      %p101 = scmp.ne.s32.totalorder %s93, %s96
      %p102 = scmp.eq.s32.totalorder %s15, 0
      %p103 = por %p101, %p102
      %p104 = scmp.ne.s32.totalorder %s93, %s96
      %p105 = scmp.eq.s32.totalorder %s20, 1
      %p106 = por %p104, %p105
      %p107 = scmp.ne.s32.totalorder %s96, %s97
      %p108 = scmp.eq.s32.totalorder %s20, 0
      %p109 = por %p107, %p108
      %p110 = scmp.ne.s32.totalorder %s96, %s97
      %p111 = scmp.eq.s32.totalorder %s21, 1
      %p112 = por %p110, %p111
      %p114 = scmp.ne.s32.totalorder %s97, %s113
      %p115 = scmp.eq.s32.totalorder %s21, 0
      %p116 = por %p114, %p115
      %p117 = scmp.le.s32.totalorder 1, %s15
      %p118 = scmp.lt.s32.totalorder %s15, 3
      %p119 = pnand %p117, %p118
      %p120 = pneg %p119
      // Predicated region
      $region9: #{tpu_custom_call.1} parent=5 // pred_check
        _
      $region10: #{tpu_custom_call.1} parent=5 // pred_check_branch
        %122 = sbr.rel (%p119) target = $region12
      $region11: #{tpu_custom_call.1} parent=5 // pred_region
        %s123 = ssub.s32 %s15, 1
        // Predicated region
        $region13: #{tpu_custom_call.1} parent=11 // pred_check
          %p124 = pneg %p81
        $region14: #{tpu_custom_call.1} parent=11 // pred_check_branch
          %126 = sbr.rel (%p124) target = $region16
        $region15: #{tpu_custom_call.1} parent=11 // pred_region
          %s127 = smul.u32 2, %s25
          %s129 = ssub.s32 1024, 1024
          %130 = vsyncadd [#allocation6], %s129
          %s131 = smul.addr %s127, 128
          %s132 = scalar_lea.hbm %s1, %s131
          %s133 = sshll.u32 [#allocation5], 4
          %s134 = int_to_ptr.vmem [resolvable:$true] %s133
          %139 = dma.hbm_to_vmem [thread:$0]  %s132, 1024, %s134, [#allocation6], 256, 256, 16
        $region16: #{tpu_custom_call.1} parent=11 // pred_fallthru
          _
      $region12: #{tpu_custom_call.1} parent=5 // pred_fallthru
        _
      %p140 = scmp.lt.s32.totalorder %s15, 2
      // Predicated region
      $region17: #{tpu_custom_call.1} parent=5 // pred_check
        %p141 = pneg %p140
      $region18: #{tpu_custom_call.1} parent=5 // pred_check_branch
        %143 = sbr.rel (%p141) target = $region20
      $region19: #{tpu_custom_call.1} parent=5 // pred_region
        // Predicated region
        $region21: #{tpu_custom_call.1} parent=19 // pred_check
          %p144 = pneg %p49
        $region22: #{tpu_custom_call.1} parent=19 // pred_check_branch
          %146 = sbr.rel (%p144) target = $region24
        $region23: #{tpu_custom_call.1} parent=19 // pred_region
          %s147 = sand.u32 %s39, 1
          %s148 = scalar_lea.sflag [#allocation3], %s147
          %s149 = sand.u32 %s39, 1
          %s150 = smul.addr %s149, 64
          %s151 = scalar_lea.vmem [#allocation2], %s150
          %s152 = smul.u32 2, %s23
          %s154 = ssub.s32 1024, 1024
          %155 = vsyncadd %s148, %s154
          %s156 = smul.addr %s22, 8
          %s157 = sadd.s32 %s152, %s156
          %s158 = smul.addr %s157, 128
          %s159 = scalar_lea.hbm %s0, %s158
          %s160 = sshll.u32 %s151, 4
          %s161 = int_to_ptr.vmem [resolvable:$true] %s160
          %166 = dma.hbm_to_vmem [thread:$0]  %s159, 1024, %s161, %s148, 256, 256, 16
        $region24: #{tpu_custom_call.1} parent=19 // pred_fallthru
          _
      $region20: #{tpu_custom_call.1} parent=5 // pred_fallthru
        _
      %p167 = scmp.le.s32.totalorder 1, %s15
      %p168 = scmp.lt.s32.totalorder %s15, 3
      %p169 = pnand %p167, %p168
      %p170 = pneg %p169
      // Predicated region
      $region25: #{tpu_custom_call.1} parent=5 // pred_check
        _
      $region26: #{tpu_custom_call.1} parent=5 // pred_check_branch
        %172 = sbr.rel (%p169) target = $region28
      $region27: #{tpu_custom_call.1} parent=5 // pred_region
        %s173 = ssub.s32 %s15, 1
        %s174 = sand.u32 %s42, 1
        %s175 = scalar_lea.sflag [#allocation3], %s174
        %s176 = sand.u32 %s42, 1
        %s177 = smul.addr %s176, 64
        %s178 = scalar_lea.vmem [#allocation2], %s177
        // Predicated region
        $region29: #{tpu_custom_call.1} parent=27 // pred_check
          %p179 = pneg %p55
        $region30: #{tpu_custom_call.1} parent=27 // pred_check_branch
          %181 = sbr.rel (%p179) target = $region32
        $region31: #{tpu_custom_call.1} parent=27 // pred_region
          %182 = dma.done %s175, 1024
        $region32: #{tpu_custom_call.1} parent=27 // pred_fallthru
          _
        // Predicated region
        $region33: #{tpu_custom_call.1} parent=27 // pred_check
          %p183 = pneg %p81
        $region34: #{tpu_custom_call.1} parent=27 // pred_check_branch
          %185 = sbr.rel (%p183) target = $region36
        $region35: #{tpu_custom_call.1} parent=27 // pred_region
          %186 = dma.done [#allocation6], 1024
        $region36: #{tpu_custom_call.1} parent=27 // pred_fallthru
          _
        %s187 = sand.u32 %s42, 1
        %s188 = scalar_lea.sflag [#allocation3], %s187
        %s189 = sand.u32 %s42, 1
        %s190 = smul.addr %s189, 64
        %s191 = scalar_lea.vmem [#allocation2], %s190
        %p192 = pneg %p55
        %p193 = pneg %p52
        %p194 = pneg %p81
        %p195 = pneg %p78
        %p196 = pneg %p109
        %p197 = pneg %p106
        %s198 = sand.u32 %s96, 1
        %s199 = scalar_lea.sflag [#allocation4], %s198
        %s200 = sand.u32 %s96, 1
        %s201 = smul.addr %s200, 64
        %s202 = scalar_lea.vmem [#allocation7], %s201
        %s203 = smul.u32 2, %s25
        %s204 = smul.u32 2, %s25
        %s205 = smul.u32 2, %s25
        %v206 = vld [vmem:[%s178] sm:$0xff]
        %v207 = vld [vmem:[%s178 + $0x8] sm:$0xff]
        %v208 = vld [vmem:[%s178 + $0x10] sm:$0xff]
        %v209 = vld [vmem:[%s178 + $0x18] sm:$0xff]
        %v210 = vld [vmem:[%s178 + $0x20] sm:$0xff]
        %v211 = vld [vmem:[%s178 + $0x28] sm:$0xff]
        %v212 = vld [vmem:[%s178 + $0x30] sm:$0xff]
        %v213 = vld [vmem:[%s178 + $0x38] sm:$0xff]
        %v214 = vld [vmem:[#allocation5] sm:$0xff]
        %v215 = vld [vmem:[#allocation5 + $0x8] sm:$0xff]
        %v216 = vld [vmem:[#allocation5 + $0x10] sm:$0xff]
        %v217 = vld [vmem:[#allocation5 + $0x18] sm:$0xff]
        %v218 = vld [vmem:[#allocation5 + $0x20] sm:$0xff]
        %v219 = vld [vmem:[#allocation5 + $0x28] sm:$0xff]
        %v220 = vld [vmem:[#allocation5 + $0x30] sm:$0xff]
        %v221 = vld [vmem:[#allocation5 + $0x38] sm:$0xff]
        %v222 = vadd.f32 %v206, %v214
        %v223 = vadd.f32 %v207, %v215
        %v224 = vadd.f32 %v208, %v216
        %v225 = vadd.f32 %v209, %v217
        %v226 = vadd.f32 %v210, %v218
        %v227 = vadd.f32 %v211, %v219
        %v228 = vadd.f32 %v212, %v220
        %v229 = vadd.f32 %v213, %v221
        %230 = vst [vmem:[%s202] sm:$0xff] %v222
        %231 = vst [vmem:[%s202 + $0x8] sm:$0xff] %v223
        %232 = vst [vmem:[%s202 + $0x10] sm:$0xff] %v224
        %233 = vst [vmem:[%s202 + $0x18] sm:$0xff] %v225
        %234 = vst [vmem:[%s202 + $0x20] sm:$0xff] %v226
        %235 = vst [vmem:[%s202 + $0x28] sm:$0xff] %v227
        %236 = vst [vmem:[%s202 + $0x30] sm:$0xff] %v228
        %237 = vst [vmem:[%s202 + $0x38] sm:$0xff] %v229
        %s238 = sand.u32 %s96, 1
        %s239 = scalar_lea.sflag [#allocation4], %s238
        %s240 = sand.u32 %s96, 1
        %s241 = smul.addr %s240, 64
        %s242 = scalar_lea.vmem [#allocation7], %s241
        // Predicated region
        $region37: #{tpu_custom_call.1} parent=27 // pred_check
          %p243 = pneg %p106
        $region38: #{tpu_custom_call.1} parent=27 // pred_check_branch
          %245 = sbr.rel (%p243) target = $region40
        $region39: #{tpu_custom_call.1} parent=27 // pred_region
          %s246 = smul.u32 2, %s25
          %s248 = ssub.s32 1024, 1024
          %249 = vsyncadd %s239, %s248
          %s250 = smul.addr %s24, 8
          %s251 = sadd.s32 %s246, %s250
          %s252 = smul.addr %s251, 128
          %s253 = scalar_lea.hbm %s2, %s252
          %s254 = sshll.u32 %s242, 4
          %s255 = int_to_ptr.vmem [resolvable:$true] %s254
          %260 = dma.vmem_to_hbm [thread:$0]  %s255, 1024, %s253, %s239, 256, 256, 16
        $region40: #{tpu_custom_call.1} parent=27 // pred_fallthru
          _
      $region28: #{tpu_custom_call.1} parent=5 // pred_fallthru
        _
      %p261 = scmp.le.s32.totalorder 2, %s15
      // Predicated region
      $region41: #{tpu_custom_call.1} parent=5 // pred_check
        %p262 = pneg %p261
      $region42: #{tpu_custom_call.1} parent=5 // pred_check_branch
        %264 = sbr.rel (%p262) target = $region44
      $region43: #{tpu_custom_call.1} parent=5 // pred_region
        %s265 = ssub.s32 %s15, 2
        // Predicated region
        $region45: #{tpu_custom_call.1} parent=43 // pred_check
          %p266 = pneg %p112
        $region46: #{tpu_custom_call.1} parent=43 // pred_check_branch
          %268 = sbr.rel (%p266) target = $region48
        $region47: #{tpu_custom_call.1} parent=43 // pred_region
          %s269 = sand.u32 %s97, 1
          %s270 = scalar_lea.sflag [#allocation4], %s269
          %s271 = sand.u32 %s97, 1
          %s272 = smul.addr %s271, 64
          %s273 = scalar_lea.vmem [#allocation7], %s272
          %274 = dma.done %s270, 1024
        $region48: #{tpu_custom_call.1} parent=43 // pred_fallthru
          _
      $region44: #{tpu_custom_call.1} parent=5 // pred_fallthru
        _
    $region6: #{tpu_custom_call.1} parent=1 // loop_footer
      %s19 = sadd.s32 1, %s15
    $region7: #{tpu_custom_call.1} parent=1 // loop_footer_branch
      %14 = sbr.rel target = $region3
    $region8: #{tpu_custom_call.1} parent=1 // loop_exit
      _
    %275 = vsyncpa [#allocation3], 1
    %s276 = scalar_lea.sflag [#allocation3], 1
    %277 = vsyncpa %s276, 1
    %278 = vsyncpa [#allocation6], 1
    %279 = vsyncpa [#allocation4], 1
    %s280 = scalar_lea.sflag [#allocation4], 1
    %281 = vsyncpa %s280, 1

</llo_original>
